<compile_context>
chip_gen: v7x
topology: tpu7x:2x2x1
jax: 0.10.0
libtpu: 0.0.40
codegen_flags: <defaults>
</compile_context>

<pallas_src>
import jax
import jax.numpy as jnp
from jax.experimental import pallas as pl
from jax.experimental.pallas import tpu as pltpu

F_PAD = 128  # lane width; hidden dims (8, 9) are zero-padded to 128 (exact: inert zeros)


def _round_up(n, m):
    return ((n + m - 1) // m) * m


def mlp_kernel(x_ref, w1_ref, w2_ref, w3_ref, b_ref, o_ref):
    """Fused ReLU(ReLU(x@W1+b1)@W2+b2)@W3+b3 on one (TB, in_f) batch tile."""
    # In-kernel cast of the f32 input to the MXU operand dtype (VPU slot, free).
    x = x_ref[...].astype(w1_ref.dtype)
    h1 = jnp.dot(x, w1_ref[...], preferred_element_type=jnp.float32) + b_ref[0:1, :]
    h1 = jnp.maximum(h1, 0.0)
    h2 = (jnp.dot(h1.astype(w2_ref.dtype), w2_ref[...],
                  preferred_element_type=jnp.float32) + b_ref[1:2, :])
    h2 = jnp.maximum(h2, 0.0)
    out = (jnp.dot(h2.astype(w3_ref.dtype), w3_ref[...],
                   preferred_element_type=jnp.float32) + b_ref[2:3, :])
    # Store only the real output lanes; o_ref is (TB, out_f).
    o_ref[...] = out[:, : o_ref.shape[1]].astype(o_ref.dtype)


def prepare_params(params, compute_dtype=jnp.bfloat16):
    """One-time padding / dtype cast of weights + packing of biases."""
    w1, b1, w2, b2, w3, b3 = params
    in_f = w1.shape[0]
    out_f = w3.shape[1]
    assert max(w1.shape[1], w2.shape[0], w2.shape[1], w3.shape[0], out_f) <= F_PAD

    def pad2(a, rows, cols):
        return jnp.pad(a, ((0, rows - a.shape[0]), (0, cols - a.shape[1])))

    w1p = pad2(w1, in_f, F_PAD).astype(compute_dtype)     # (in_f, 128): output dim only
    w2p = pad2(w2, F_PAD, F_PAD).astype(compute_dtype)    # (128, 128)
    w3p = pad2(w3, F_PAD, F_PAD).astype(compute_dtype)    # (128, 128)

    bias = jnp.zeros((8, F_PAD), jnp.float32)              # 3 biases, one (8,128) DMA
    bias = bias.at[0, : b1.shape[1]].set(b1[0])
    bias = bias.at[1, : b2.shape[1]].set(b2[0])
    bias = bias.at[2, : b3.shape[1]].set(b3[0])
    return (w1p, w2p, w3p, bias, out_f)


def mlp_forward(x, prepared, *, tb=2048):
    """Run the fused MLP. x: (B, in_features) f32. Returns (B, out_features) f32."""
    w1p, w2p, w3p, bias, out_f = prepared
    B, in_f = x.shape
    assert in_f == w1p.shape[0]

    # Batch tile: multiple of 8 sublanes, capped at tb; sized so the grid has
    # >=2 steps whenever B allows (keeps both v7x TensorCores busy).
    TB = min(tb, max(8, _round_up(-(-B // 2), 8)))
    Bp = _round_up(B, TB)
    xp = jnp.pad(x, ((0, Bp - B), (0, 0))) if Bp != B else x  # rows only, cols unpadded

    grid = (Bp // TB,)
    out = pl.pallas_call(
        mlp_kernel,
        out_shape=jax.ShapeDtypeStruct((Bp, out_f), jnp.float32),
        grid=grid,
        in_specs=[
            pl.BlockSpec((TB, in_f), lambda i: (i, 0)),      # x: streamed, unpadded lanes
            pl.BlockSpec((in_f, F_PAD), lambda i: (0, 0)),   # W1: weight-stationary
            pl.BlockSpec((F_PAD, F_PAD), lambda i: (0, 0)),  # W2
            pl.BlockSpec((F_PAD, F_PAD), lambda i: (0, 0)),  # W3
            pl.BlockSpec((8, F_PAD), lambda i: (0, 0)),      # packed biases
        ],
        out_specs=pl.BlockSpec((TB, out_f), lambda i: (i, 0)),  # unpadded writeback
        compiler_params=pltpu.CompilerParams(
            dimension_semantics=("parallel",),  # batch axis -> 2 TCs on v7x
        ),
    )(xp, w1p, w2p, w3p, bias)

    return out[:B]


def init_params(key, in_features=4, h1=8, h2=9, out_features=3):
    # Deterministic init mimicking nn.Linear's uniform(-1/sqrt(fan_in), +1/sqrt(fan_in)).
    ks = jax.random.split(key, 6)

    def lin(kw, kb, fan_in, fan_out):
        bound = 1.0 / jnp.sqrt(fan_in)
        w = jax.random.uniform(kw, (fan_in, fan_out), jnp.float32, -bound, bound)
        b = jax.random.uniform(kb, (1, fan_out), jnp.float32, -bound, bound)
        return w, b

    w1, b1 = lin(ks[0], ks[1], in_features, h1)
    w2, b2 = lin(ks[2], ks[3], h1, h2)
    w3, b3 = lin(ks[4], ks[5], h2, out_features)
    return (w1, b1, w2, b2, w3, b3)


def reference_forward(x, params):
    w1, b1, w2, b2, w3, b3 = params
    h = jnp.maximum(x @ w1 + b1, 0.0)
    h = jnp.maximum(h @ w2 + b2, 0.0)
    return h @ w3 + b3


if __name__ == "__main__":
    key = jax.random.PRNGKey(0)
    k_x, k_p, k_xl = jax.random.split(key, 3)

    in_features, h1, h2, out_features = 4, 8, 9, 3
    params = init_params(k_p, in_features, h1, h2, out_features)

    # --- small batch, f32 MXU operands: exact match vs reference ---
    batch = 8
    x = jax.random.normal(k_x, (batch, in_features), jnp.float32)
    ref = reference_forward(x, params)
    prep_f32 = prepare_params(params, compute_dtype=jnp.float32)
    out = jax.block_until_ready(mlp_forward(x, prep_f32))
    assert out.shape == (batch, out_features)
    assert jnp.allclose(out, ref, atol=1e-5, rtol=1e-5), "f32 mismatch vs reference"

    # --- large batch: exercises the multi-step grid (2 tiles of 512) + parallel axis ---
    big_batch = 1024
    xl = jax.random.normal(k_xl, (big_batch, in_features), jnp.float32)
    out_l = jax.block_until_ready(mlp_forward(xl, prep_f32))
    ref_l = reference_forward(xl, params)
    assert out_l.shape == (big_batch, out_features)
    assert jnp.allclose(out_l, ref_l, atol=1e-5, rtol=1e-5), "large-batch mismatch"

    # --- default bf16 MXU operands (v6e/v7x fast path), f32 accumulation ---
    prep_bf16 = prepare_params(params)  # bf16 default
    out_bf16 = jax.block_until_ready(mlp_forward(x, prep_bf16))
    assert jnp.allclose(out_bf16, ref, atol=1e-1, rtol=1e-1), "bf16 path diverged"

    print("KERNEL_OK")
</pallas_src>

<mosaic_0001>
module attributes {stable_mosaic.version = 11 : i64} {
  func.func @mlp_kernel(%arg0: i32, %arg1: memref<8x4xf32, #tpu.memory_space<vmem>>, %arg2: memref<4x128xf32, #tpu.memory_space<vmem>>, %arg3: memref<128x128xf32, #tpu.memory_space<vmem>>, %arg4: memref<128x128xf32, #tpu.memory_space<vmem>>, %arg5: memref<8x128xf32, #tpu.memory_space<vmem>>, %arg6: memref<8x3xf32, #tpu.memory_space<vmem>>) attributes {dimension_semantics = [#tpu.dimension_semantics<parallel>], iteration_bounds = array<i64: 1>, scalar_prefetch = 0 : i64, scratch_operands = 0 : i64, tpu.core_type = #tpu.core_type<tc>, window_params = [{transform_indices = @transform_0, window_bounds = array<i64: 8, 4>}, {pipeline_mode = #tpu.pipeline_mode<synchronous>, transform_indices = @transform_1, window_bounds = array<i64: 4, 128>}, {pipeline_mode = #tpu.pipeline_mode<synchronous>, transform_indices = @transform_2, window_bounds = array<i64: 128, 128>}, {pipeline_mode = #tpu.pipeline_mode<synchronous>, transform_indices = @transform_3, window_bounds = array<i64: 128, 128>}, {pipeline_mode = #tpu.pipeline_mode<synchronous>, transform_indices = @transform_4, window_bounds = array<i64: 8, 128>}, {transform_indices = @transform_5, window_bounds = array<i64: 8, 3>}]} {
    %c0 = arith.constant 0 : index
    %c0_0 = arith.constant 0 : index
    %0 = vector.load %arg1[%c0, %c0_0] : memref<8x4xf32, #tpu.memory_space<vmem>>, vector<8x4xf32>
    %c0_1 = arith.constant 0 : index
    %c0_2 = arith.constant 0 : index
    %1 = vector.load %arg2[%c0_1, %c0_2] : memref<4x128xf32, #tpu.memory_space<vmem>>, vector<4x128xf32>
    %cst = arith.constant dense<0.000000e+00> : vector<8x128xf32>
    %2 = tpu.matmul %0, %1, %cst {dimension_numbers = #tpu.dot_dimension_numbers<[1], [0], [0], [1], [0, 0, 1, 1], [], []>} : vector<8x4xf32>, vector<4x128xf32>, vector<8x128xf32> -> vector<8x128xf32>
    %c0_3 = arith.constant 0 : index
    %c0_4 = arith.constant 0 : index
    %3 = vector.load %arg5[%c0_3, %c0_4] : memref<8x128xf32, #tpu.memory_space<vmem>>, vector<1x128xf32>
    %4 = vector.broadcast %3 : vector<1x128xf32> to vector<8x128xf32>
    %5 = arith.addf %2, %4 : vector<8x128xf32>
    %cst_5 = arith.constant 0.000000e+00 : f32
    %6 = vector.broadcast %cst_5 : f32 to vector<8x128xf32>
    %7 = arith.maximumf %5, %6 : vector<8x128xf32>
    %c0_6 = arith.constant 0 : index
    %c0_7 = arith.constant 0 : index
    %8 = vector.load %arg3[%c0_6, %c0_7] : memref<128x128xf32, #tpu.memory_space<vmem>>, vector<128x128xf32>
    %cst_8 = arith.constant dense<0.000000e+00> : vector<8x128xf32>
    %9 = tpu.matmul %7, %8, %cst_8 {dimension_numbers = #tpu.dot_dimension_numbers<[1], [0], [0], [1], [0, 0, 1, 1], [], []>} : vector<8x128xf32>, vector<128x128xf32>, vector<8x128xf32> -> vector<8x128xf32>
    %c1 = arith.constant 1 : index
    %c0_9 = arith.constant 0 : index
    %10 = vector.load %arg5[%c1, %c0_9] : memref<8x128xf32, #tpu.memory_space<vmem>>, vector<1x128xf32>
    %11 = vector.broadcast %10 : vector<1x128xf32> to vector<8x128xf32>
    %12 = arith.addf %9, %11 : vector<8x128xf32>
    %cst_10 = arith.constant 0.000000e+00 : f32
    %13 = vector.broadcast %cst_10 : f32 to vector<8x128xf32>
    %14 = arith.maximumf %12, %13 : vector<8x128xf32>
    %c0_11 = arith.constant 0 : index
    %c0_12 = arith.constant 0 : index
    %15 = vector.load %arg4[%c0_11, %c0_12] : memref<128x128xf32, #tpu.memory_space<vmem>>, vector<128x128xf32>
    %cst_13 = arith.constant dense<0.000000e+00> : vector<8x128xf32>
    %16 = tpu.matmul %14, %15, %cst_13 {dimension_numbers = #tpu.dot_dimension_numbers<[1], [0], [0], [1], [0, 0, 1, 1], [], []>} : vector<8x128xf32>, vector<128x128xf32>, vector<8x128xf32> -> vector<8x128xf32>
    %c2 = arith.constant 2 : index
    %c0_14 = arith.constant 0 : index
    %17 = vector.load %arg5[%c2, %c0_14] : memref<8x128xf32, #tpu.memory_space<vmem>>, vector<1x128xf32>
    %18 = vector.broadcast %17 : vector<1x128xf32> to vector<8x128xf32>
    %19 = arith.addf %16, %18 : vector<8x128xf32>
    %20 = vector.extract_strided_slice %19 {offsets = [0, 0], sizes = [8, 3], strides = [1, 1]} : vector<8x128xf32> to vector<8x3xf32>
    %c0_15 = arith.constant 0 : index
    %c0_16 = arith.constant 0 : index
    %21 = vector.load %arg6[%c0_15, %c0_16] : memref<8x3xf32, #tpu.memory_space<vmem>>, vector<8x3xf32>
    tpu.vector_store %arg6[%c0_15, %c0_16], %20 {strides = array<i32>} : memref<8x3xf32, #tpu.memory_space<vmem>>, vector<8x3xf32>,
    return
  }
  func.func @transform_0(%arg0: i32) -> (i32, i32) {
    %c0_i32 = arith.constant 0 : i32
    %c0_i32_0 = arith.constant 0 : i32
    return %arg0, %c0_i32 : i32, i32
  }
  func.func @transform_1(%arg0: i32) -> (i32, i32) {
    %c0_i32 = arith.constant 0 : i32
    %c0_i32_0 = arith.constant 0 : i32
    %c0_i32_1 = arith.constant 0 : i32
    return %c0_i32, %c0_i32_0 : i32, i32
  }
  func.func @transform_2(%arg0: i32) -> (i32, i32) {
    %c0_i32 = arith.constant 0 : i32
    %c0_i32_0 = arith.constant 0 : i32
    %c0_i32_1 = arith.constant 0 : i32
    return %c0_i32, %c0_i32_0 : i32, i32
  }
  func.func @transform_3(%arg0: i32) -> (i32, i32) {
    %c0_i32 = arith.constant 0 : i32
    %c0_i32_0 = arith.constant 0 : i32
    %c0_i32_1 = arith.constant 0 : i32
    return %c0_i32, %c0_i32_0 : i32, i32
  }
  func.func @transform_4(%arg0: i32) -> (i32, i32) {
    %c0_i32 = arith.constant 0 : i32
    %c0_i32_0 = arith.constant 0 : i32
    %c0_i32_1 = arith.constant 0 : i32
    return %c0_i32, %c0_i32_0 : i32, i32
  }
  func.func @transform_5(%arg0: i32) -> (i32, i32) {
    %c0_i32 = arith.constant 0 : i32
    %c0_i32_0 = arith.constant 0 : i32
    return %arg0, %c0_i32 : i32, i32
  }
}

</mosaic_0001>

<llo_original>
// kernel: tpu_custom_call.1
$region0: #{tpu_custom_call.1}
  #allocation0 [shape = 'u32[]', space=smem, size = 0x4, offset = 0x4, fixed_abs, tag = 'smem constant byte address 0x4 - core index']
  #allocation1 [shape = 'u32[144,128]{1,0:T(1,128)}', space=vmem, size = 0x12000, scoped, tag = 'internal scratch']
  %s0 = inlined_call_operand.vmem [shape: f32[8,4], index: 0, kind: input, shape index: {}]
  %s1 = inlined_call_operand.vmem [shape: f32[4,128], index: 1, kind: input, shape index: {}]
  %s2 = inlined_call_operand.hbm [shape: f32[128,128], index: 2, kind: input, shape index: {}]
  %s3 = inlined_call_operand.hbm [shape: f32[128,128], index: 3, kind: input, shape index: {}]
  %s4 = inlined_call_operand.vmem [shape: f32[8,128], index: 4, kind: input, shape index: {}]
  %s5 = inlined_call_operand.vmem [shape: f32[8,3], index: 5, kind: output, shape index: {}]
  %s6 = sld [smem:[#allocation0]]
  $region38: #{tpu_custom_call.1} parent=0
    _
  %s8 = ssub.s32 1, %s6
  %s9 = scalar_select 0, %s8, %s6
  $region1: #{tpu_custom_call.1} parent=0
    #allocation2 [shape = 'u8[65536]{0}', space=vmem, size = 0x10000, scoped, tag = 'input window, operand 2, single buffered']
    #allocation3 [shape = 's32[1]{0}', space=sflag, size = 0x4, scoped, tag = 'scoped memory for tpu_custom_call.1']
    #allocation4 [shape = 'u8[65536]{0}', space=vmem, size = 0x10000, scoped, tag = 'input window, operand 3, single buffered']
    #allocation5 [shape = 's32[1]{0}', space=sflag, size = 0x4, scoped, tag = 'scoped memory for tpu_custom_call.1']
    %10 = vsyncpa [#allocation3], 0
    %11 = vsyncpa [#allocation5], 0
    // Predicated region
    $region2: #{tpu_custom_call.1} parent=1 // pred_check
      _
    $region3: #{tpu_custom_call.1} parent=1 // pred_check_branch
      %13 = sbr.rel (0) target = $region5
    $region4: #{tpu_custom_call.1} parent=1 // pred_region
      _
    $region5: #{tpu_custom_call.1} parent=1 // pred_fallthru
      _
    // Predicated region
    $region6: #{tpu_custom_call.1} parent=1 // pred_check
      _
    $region7: #{tpu_custom_call.1} parent=1 // pred_check_branch
      %15 = sbr.rel (0) target = $region9
    $region8: #{tpu_custom_call.1} parent=1 // pred_region
      _
    $region9: #{tpu_custom_call.1} parent=1 // pred_fallthru
      _
    // Predicated region
    $region10: #{tpu_custom_call.1} parent=1 // pred_check
      _
    $region11: #{tpu_custom_call.1} parent=1 // pred_check_branch
      %17 = sbr.rel (0) target = $region13
    $region12: #{tpu_custom_call.1} parent=1 // pred_region
      %s19 = ssub.s32 2048, 2048
      %20 = vsyncadd [#allocation3], %s19
      %s21 = sshll.u32 [#allocation2], 4
      %s22 = int_to_ptr.vmem [resolvable:$true] %s21
      %27 = dma.hbm_to_vmem [thread:$0]  %s2, 2048, %s22, [#allocation3], 128, 128, 8
    $region13: #{tpu_custom_call.1} parent=1 // pred_fallthru
      _
    // Predicated region
    $region14: #{tpu_custom_call.1} parent=1 // pred_check
      _
    $region15: #{tpu_custom_call.1} parent=1 // pred_check_branch
      %29 = sbr.rel (0) target = $region17
    $region16: #{tpu_custom_call.1} parent=1 // pred_region
      %s31 = ssub.s32 2048, 2048
      %32 = vsyncadd [#allocation5], %s31
      %s33 = sshll.u32 [#allocation4], 4
      %s34 = int_to_ptr.vmem [resolvable:$true] %s33
      %39 = dma.hbm_to_vmem [thread:$0]  %s3, 2048, %s34, [#allocation5], 128, 128, 8
    $region17: #{tpu_custom_call.1} parent=1 // pred_fallthru
      _
    // Predicated region
    $region18: #{tpu_custom_call.1} parent=1 // pred_check
      _
    $region19: #{tpu_custom_call.1} parent=1 // pred_check_branch
      %41 = sbr.rel (0) target = $region21
    $region20: #{tpu_custom_call.1} parent=1 // pred_region
      _
    $region21: #{tpu_custom_call.1} parent=1 // pred_fallthru
      _
    // Predicated region
    $region22: #{tpu_custom_call.1} parent=1 // pred_check
      _
    $region23: #{tpu_custom_call.1} parent=1 // pred_check_branch
      %43 = sbr.rel (0) target = $region25
    $region24: #{tpu_custom_call.1} parent=1 // pred_region
      %44 = dma.done [#allocation3], 2048
    $region25: #{tpu_custom_call.1} parent=1 // pred_fallthru
      _
    // Predicated region
    $region26: #{tpu_custom_call.1} parent=1 // pred_check
      _
    $region27: #{tpu_custom_call.1} parent=1 // pred_check_branch
      %46 = sbr.rel (0) target = $region29
    $region28: #{tpu_custom_call.1} parent=1 // pred_region
      %47 = dma.done [#allocation5], 2048
    $region29: #{tpu_custom_call.1} parent=1 // pred_fallthru
      _
    %v48 = vld [vmem:[%s0] sm:$0xff]
    %v49 = vld [vmem:[%s1] sm:$0xf]
    %v50 = vld [vmem:[%s4] sm:$0x1]
    %v51 = vlaneseq
    %v52 = vshrl.u32 %v51, 7
    %v53 = vsub.s32 0, %v52
    %v54 = vrot.slane %v50, %v53
    %vm55 = vcmask 31744
    %v57 = vsel %vm55, %v48, 0
    %vm59 = vcmask 1043456
    %v61 = vsel %vm59, %v49, 0
    %63 = vmatprep.subr.mxu0 0.0
    %64 = vmatpush1.msra.mxu0 %v61
    %65 = vmatprep.subr.mxu0 0.0
    %66 = vmatpush1.msra.mxu0 0.0
    %67 = vmatprep.subr.mxu0 0.0
    %68 = vmatpush1.msra.mxu0 0.0
    %69 = vmatprep.subr.mxu0 0.0
    %70 = vmatpush1.msra.mxu0 0.0
    %71 = vmatprep.subr.mxu0 0.0
    %72 = vmatpush1.msra.mxu0 0.0
    %73 = vmatprep.subr.mxu0 0.0
    %74 = vmatpush1.msra.mxu0 0.0
    %75 = vmatprep.subr.mxu0 0.0
    %76 = vmatpush1.msra.mxu0 0.0
    %77 = vmatprep.subr.mxu0 0.0
    %78 = vmatpush1.msra.mxu0 0.0
    %79 = vmatprep.subr.mxu0 0.0
    %80 = vmatpush1.msra.mxu0 0.0
    %81 = vmatprep.subr.mxu0 0.0
    %82 = vmatpush1.msra.mxu0 0.0
    %83 = vmatprep.subr.mxu0 0.0
    %84 = vmatpush1.msra.mxu0 0.0
    %85 = vmatprep.subr.mxu0 0.0
    %86 = vmatpush1.msra.mxu0 0.0
    %87 = vmatprep.subr.mxu0 0.0
    %88 = vmatpush1.msra.mxu0 0.0
    %89 = vmatprep.subr.mxu0 0.0
    %90 = vmatpush1.msra.mxu0 0.0
    %91 = vmatprep.subr.mxu0 0.0
    %92 = vmatpush1.msra.mxu0 0.0
    %93 = vmatprep.subr.mxu0 0.0
    %94 = vmatpush1.msra.mxu0 0.0
    %95 = vmatprep.subr.mxu0 0.0
    %96 = vmatpush1.msra.mxu0 0.0
    %97 = vmatprep.subr.mxu0 0.0
    %98 = vmatpush1.msra.mxu0 0.0
    %99 = vmatprep.subr.mxu0 0.0
    %100 = vmatpush1.msra.mxu0 0.0
    %101 = vmatprep.subr.mxu0 0.0
    %102 = vmatpush1.msra.mxu0 0.0
    %103 = vmatprep.subr.mxu0 0.0
    %104 = vmatpush1.msra.mxu0 0.0
    %105 = vmatprep.subr.mxu0 0.0
    %106 = vmatpush1.msra.mxu0 0.0
    %107 = vmatprep.subr.mxu0 0.0
    %108 = vmatpush1.msra.mxu0 0.0
    %109 = vmatprep.subr.mxu0 0.0
    %110 = vmatpush1.msra.mxu0 0.0
    %111 = vmatprep.subr.mxu0 0.0
    %112 = vmatpush1.msra.mxu0 0.0
    %113 = vmatprep.subr.mxu0 0.0
    %114 = vmatpush1.msra.mxu0 0.0
    %115 = vmatprep.subr.mxu0 0.0
    %116 = vmatpush1.msra.mxu0 0.0
    %117 = vmatprep.subr.mxu0 0.0
    %118 = vmatpush1.msra.mxu0 0.0
    %119 = vmatprep.subr.mxu0 0.0
    %120 = vmatpush1.msra.mxu0 0.0
    %121 = vmatprep.subr.mxu0 0.0
    %122 = vmatpush1.msra.mxu0 0.0
    %123 = vmatprep.subr.mxu0 0.0
    %124 = vmatpush1.msra.mxu0 0.0
    %125 = vmatprep.subr.mxu0 0.0
    %126 = vmatpush1.msra.mxu0 0.0
    %127 = vmatprep.mubr.f32.mxu0 0.0
    %128 = vmatmul.mubr.f32.gmra.mrb[0].mxu0 %v57
    %v129 = vpop.f32.mrb[0].mxu0
    %v130 = vadd.f32 %v54, %v129
    %v131 = vpop.f32.mrb[0].mxu0
    %132 = vdwg.mxu0
    %v133 = vmax.f32 %v130, 0.0
    %v134 = vld [vmem:[#allocation2] sm:$0xff]
    %v135 = vld [vmem:[#allocation2 + $0x8] sm:$0xff]
    %v136 = vld [vmem:[#allocation2 + $0x10] sm:$0xff]
    %v137 = vld [vmem:[#allocation2 + $0x18] sm:$0xff]
    %v138 = vld [vmem:[#allocation2 + $0x20] sm:$0xff]
    %v139 = vld [vmem:[#allocation2 + $0x28] sm:$0xff]
    %v140 = vld [vmem:[#allocation2 + $0x30] sm:$0xff]
    %v141 = vld [vmem:[#allocation2 + $0x38] sm:$0xff]
    %v142 = vld [vmem:[#allocation2 + $0x40] sm:$0xff]
    %v143 = vld [vmem:[#allocation2 + $0x48] sm:$0xff]
    %v144 = vld [vmem:[#allocation2 + $0x50] sm:$0xff]
    %v145 = vld [vmem:[#allocation2 + $0x58] sm:$0xff]
    %v146 = vld [vmem:[#allocation2 + $0x60] sm:$0xff]
    %v147 = vld [vmem:[#allocation2 + $0x68] sm:$0xff]
    %v148 = vld [vmem:[#allocation2 + $0x70] sm:$0xff]
    %v149 = vld [vmem:[#allocation2 + $0x78] sm:$0xff]
    %v150 = vld [vmem:[%s4 + $0x1] sm:$0x1]
    %v151 = vlaneseq
    %v152 = vshrl.u32 %v151, 7
    %v153 = vsub.s32 0, %v152
    %v154 = vrot.slane %v150, %v153
    %155 = vmatprep.subr.mxu0 0.0
    %156 = vmatpush1.msra.mxu0 %v134
    %157 = vmatprep.subr.mxu0 0.0
    %158 = vmatpush1.msra.mxu0 %v135
    %159 = vmatprep.subr.mxu0 0.0
    %160 = vmatpush1.msra.mxu0 %v136
    %161 = vmatprep.subr.mxu0 0.0
    %162 = vmatpush1.msra.mxu0 %v137
    %163 = vmatprep.subr.mxu0 0.0
    %164 = vmatpush1.msra.mxu0 %v138
    %165 = vmatprep.subr.mxu0 0.0
    %166 = vmatpush1.msra.mxu0 %v139
    %167 = vmatprep.subr.mxu0 0.0
    %168 = vmatpush1.msra.mxu0 %v140
    %169 = vmatprep.subr.mxu0 0.0
    %170 = vmatpush1.msra.mxu0 %v141
    %171 = vmatprep.subr.mxu0 0.0
    %172 = vmatpush1.msra.mxu0 %v142
    %173 = vmatprep.subr.mxu0 0.0
    %174 = vmatpush1.msra.mxu0 %v143
    %175 = vmatprep.subr.mxu0 0.0
    %176 = vmatpush1.msra.mxu0 %v144
    %177 = vmatprep.subr.mxu0 0.0
    %178 = vmatpush1.msra.mxu0 %v145
    %179 = vmatprep.subr.mxu0 0.0
    %180 = vmatpush1.msra.mxu0 %v146
    %181 = vmatprep.subr.mxu0 0.0
    %182 = vmatpush1.msra.mxu0 %v147
    %183 = vmatprep.subr.mxu0 0.0
    %184 = vmatpush1.msra.mxu0 %v148
    %185 = vmatprep.subr.mxu0 0.0
    %186 = vmatpush1.msra.mxu0 %v149
    %187 = vmatprep.subr.mxu0 0.0
    %188 = vmatpush1.msra.mxu0 0.0
    %189 = vmatprep.subr.mxu0 0.0
    %190 = vmatpush1.msra.mxu0 0.0
    %191 = vmatprep.subr.mxu0 0.0
    %192 = vmatpush1.msra.mxu0 0.0
    %193 = vmatprep.subr.mxu0 0.0
    %194 = vmatpush1.msra.mxu0 0.0
    %195 = vmatprep.subr.mxu0 0.0
    %196 = vmatpush1.msra.mxu0 0.0
    %197 = vmatprep.subr.mxu0 0.0
    %198 = vmatpush1.msra.mxu0 0.0
    %199 = vmatprep.subr.mxu0 0.0
    %200 = vmatpush1.msra.mxu0 0.0
    %201 = vmatprep.subr.mxu0 0.0
    %202 = vmatpush1.msra.mxu0 0.0
    %203 = vmatprep.subr.mxu0 0.0
    %204 = vmatpush1.msra.mxu0 0.0
    %205 = vmatprep.subr.mxu0 0.0
    %206 = vmatpush1.msra.mxu0 0.0
    %207 = vmatprep.subr.mxu0 0.0
    %208 = vmatpush1.msra.mxu0 0.0
    %209 = vmatprep.subr.mxu0 0.0
    %210 = vmatpush1.msra.mxu0 0.0
    %211 = vmatprep.subr.mxu0 0.0
    %212 = vmatpush1.msra.mxu0 0.0
    %213 = vmatprep.subr.mxu0 0.0
    %214 = vmatpush1.msra.mxu0 0.0
    %215 = vmatprep.subr.mxu0 0.0
    %216 = vmatpush1.msra.mxu0 0.0
    %217 = vmatprep.subr.mxu0 0.0
    %218 = vmatpush1.msra.mxu0 0.0
    %219 = vmatprep.mubr.f32.mxu0 0.0
    %220 = vmatmul.mubr.f32.gmra.mrb[0].mxu0 %v133
    %v221 = vpop.f32.mrb[0].mxu0
    %v222 = vadd.f32 %v154, %v221
    %v223 = vpop.f32.mrb[0].mxu0
    %224 = vdwg.mxu0
    %v225 = vmax.f32 %v222, 0.0
    %v226 = vld [vmem:[#allocation4] sm:$0xff]
    %v227 = vld [vmem:[#allocation4 + $0x8] sm:$0xff]
    %v228 = vld [vmem:[#allocation4 + $0x10] sm:$0xff]
    %v229 = vld [vmem:[#allocation4 + $0x18] sm:$0xff]
    %v230 = vld [vmem:[#allocation4 + $0x20] sm:$0xff]
    %v231 = vld [vmem:[#allocation4 + $0x28] sm:$0xff]
    %v232 = vld [vmem:[#allocation4 + $0x30] sm:$0xff]
    %v233 = vld [vmem:[#allocation4 + $0x38] sm:$0xff]
    %v234 = vld [vmem:[#allocation4 + $0x40] sm:$0xff]
    %v235 = vld [vmem:[#allocation4 + $0x48] sm:$0xff]
    %v236 = vld [vmem:[#allocation4 + $0x50] sm:$0xff]
    %v237 = vld [vmem:[#allocation4 + $0x58] sm:$0xff]
    %v238 = vld [vmem:[#allocation4 + $0x60] sm:$0xff]
    %v239 = vld [vmem:[#allocation4 + $0x68] sm:$0xff]
    %v240 = vld [vmem:[#allocation4 + $0x70] sm:$0xff]
    %v241 = vld [vmem:[#allocation4 + $0x78] sm:$0xff]
    %v242 = vld [vmem:[%s4 + $0x2] sm:$0x1]
    %v243 = vlaneseq
    %v244 = vshrl.u32 %v243, 7
    %v245 = vsub.s32 0, %v244
    %v246 = vrot.slane %v242, %v245
    %247 = vmatprep.subr.mxu0 0.0
    %248 = vmatpush1.msra.mxu0 %v226
    %249 = vmatprep.subr.mxu0 0.0
    %250 = vmatpush1.msra.mxu0 %v227
    %251 = vmatprep.subr.mxu0 0.0
    %252 = vmatpush1.msra.mxu0 %v228
    %253 = vmatprep.subr.mxu0 0.0
    %254 = vmatpush1.msra.mxu0 %v229
    %255 = vmatprep.subr.mxu0 0.0
    %256 = vmatpush1.msra.mxu0 %v230
    %257 = vmatprep.subr.mxu0 0.0
    %258 = vmatpush1.msra.mxu0 %v231
    %259 = vmatprep.subr.mxu0 0.0
    %260 = vmatpush1.msra.mxu0 %v232
    %261 = vmatprep.subr.mxu0 0.0
    %262 = vmatpush1.msra.mxu0 %v233
    %263 = vmatprep.subr.mxu0 0.0
    %264 = vmatpush1.msra.mxu0 %v234
    %265 = vmatprep.subr.mxu0 0.0
    %266 = vmatpush1.msra.mxu0 %v235
    %267 = vmatprep.subr.mxu0 0.0
    %268 = vmatpush1.msra.mxu0 %v236
    %269 = vmatprep.subr.mxu0 0.0
    %270 = vmatpush1.msra.mxu0 %v237
    %271 = vmatprep.subr.mxu0 0.0
    %272 = vmatpush1.msra.mxu0 %v238
    %273 = vmatprep.subr.mxu0 0.0
    %274 = vmatpush1.msra.mxu0 %v239
    %275 = vmatprep.subr.mxu0 0.0
    %276 = vmatpush1.msra.mxu0 %v240
    %277 = vmatprep.subr.mxu0 0.0
    %278 = vmatpush1.msra.mxu0 %v241
    %279 = vmatprep.subr.mxu0 0.0
    %280 = vmatpush1.msra.mxu0 0.0
    %281 = vmatprep.subr.mxu0 0.0
    %282 = vmatpush1.msra.mxu0 0.0
    %283 = vmatprep.subr.mxu0 0.0
    %284 = vmatpush1.msra.mxu0 0.0
    %285 = vmatprep.subr.mxu0 0.0
    %286 = vmatpush1.msra.mxu0 0.0
    %287 = vmatprep.subr.mxu0 0.0
    %288 = vmatpush1.msra.mxu0 0.0
    %289 = vmatprep.subr.mxu0 0.0
    %290 = vmatpush1.msra.mxu0 0.0
    %291 = vmatprep.subr.mxu0 0.0
    %292 = vmatpush1.msra.mxu0 0.0
    %293 = vmatprep.subr.mxu0 0.0
    %294 = vmatpush1.msra.mxu0 0.0
    %295 = vmatprep.subr.mxu0 0.0
    %296 = vmatpush1.msra.mxu0 0.0
    %297 = vmatprep.subr.mxu0 0.0
    %298 = vmatpush1.msra.mxu0 0.0
    %299 = vmatprep.subr.mxu0 0.0
    %300 = vmatpush1.msra.mxu0 0.0
    %301 = vmatprep.subr.mxu0 0.0
    %302 = vmatpush1.msra.mxu0 0.0
    %303 = vmatprep.subr.mxu0 0.0
    %304 = vmatpush1.msra.mxu0 0.0
    %305 = vmatprep.subr.mxu0 0.0
    %306 = vmatpush1.msra.mxu0 0.0
    %307 = vmatprep.subr.mxu0 0.0
    %308 = vmatpush1.msra.mxu0 0.0
    %309 = vmatprep.subr.mxu0 0.0
    %310 = vmatpush1.msra.mxu0 0.0
    %311 = vmatprep.mubr.f32.mxu0 0.0
    %312 = vmatmul.mubr.f32.gmra.mrb[0].mxu0 %v225
    %v313 = vpop.f32.mrb[0].mxu0
    %v314 = vadd.f32 %v246, %v313
    %v315 = vpop.f32.mrb[0].mxu0
    %316 = vdwg.mxu0
    %vm317 = vcmask 23552
    %318 = vst.msk [vmem:[%s5] sm:$0xff] %vm317, %v314
    // Predicated region
    $region30: #{tpu_custom_call.1} parent=1 // pred_check
      _
    $region31: #{tpu_custom_call.1} parent=1 // pred_check_branch
      %320 = sbr.rel (0) target = $region33
    $region32: #{tpu_custom_call.1} parent=1 // pred_region
      _
    $region33: #{tpu_custom_call.1} parent=1 // pred_fallthru
      _
    // Predicated region
    $region34: #{tpu_custom_call.1} parent=1 // pred_check
      _
    $region35: #{tpu_custom_call.1} parent=1 // pred_check_branch
      %322 = sbr.rel (0) target = $region37
    $region36: #{tpu_custom_call.1} parent=1 // pred_region
      _
    $region37: #{tpu_custom_call.1} parent=1 // pred_fallthru
      _
    %323 = vsyncpa [#allocation3], 1
    %324 = vsyncpa [#allocation5], 1

</llo_original>
